<compile_context>
chip_gen: v5e
topology: v5e:2x2
jax: 0.10.0
libtpu: 0.0.40
codegen_flags: <defaults>
</compile_context>

<pallas_src>
import functools

import jax
import jax.numpy as jnp
from jax.experimental import pallas as pl
from jax.experimental.pallas import tpu as pltpu


# Minimal sublane tile per dtype byte-width (sub-32-bit dtypes pack sublanes).
_SUBLANE = {1: 32, 2: 16, 4: 8}


def _vmem_caps():
    """(tile working-set budget, scoped vmem limit) in bytes, per generation."""
    cap = None
    try:
        info = pltpu.get_tpu_info()
        cap = int(getattr(info, "vmem_capacity_bytes", None) or 0)
    except Exception:
        cap = None
    if not cap:
        cap = 64 * 1024 * 1024  # safe floor (v7x VMEM size); works on all gens
    tile_budget = int(cap * 0.65)   # what we let our blocks + f32 temps use
    vmem_limit = int(cap * 0.75)    # scoped limit handed to Mosaic
    return tile_budget, vmem_limit


def _pick_row_tile(rows, d, dtype_bytes, budget):
    """Largest legal row tile whose working set fits `budget` bytes."""
    sub = _SUBLANE.get(dtype_bytes, 8)
    if rows <= sub:
        return rows  # full-extent block is always a legal block shape
    # double-buffered in + out blocks plus ~2 f32 temps per element
    per_row = d * (4 * dtype_bytes + 8)
    max_rows = max(sub, (budget // max(per_row, 1)) // sub * sub)
    rows_padded = pl.cdiv(rows, sub) * sub
    row_tile = min(max_rows, 1024, rows_padded)
    # keep >= 2 grid steps when possible (v7x megacore + DMA pipelining)
    if pl.cdiv(rows, row_tile) < 2 and rows >= 2 * sub:
        row_tile = pl.cdiv(pl.cdiv(rows, 2), sub) * sub
    return row_tile


def _pick_chunk_cfg(rows, d, dtype_bytes, budget):
    """(row_tile, chunk) for the two-pass feature-chunked path, or None."""
    if d % 128 != 0:
        # TODO(synk): masked partial feature chunks for D % 128 != 0.
        return None
    sub = _SUBLANE.get(dtype_bytes, 8)
    row_tile = rows if rows <= sub else sub
    per_col = row_tile * (4 * dtype_bytes + 8)
    max_chunk = budget // max(per_col, 1)
    if max_chunk < 128:
        return None
    chunk = None
    for m in range(1, d // 128 + 1):
        c = 128 * m
        if c > max_chunk:
            break
        if d % c == 0:
            chunk = c
    if chunk is None:
        return None
    return row_tile, chunk


def _ln_rows_kernel(x_ref, o_ref, *, eps, d):
    """Whole (row_tile, D) block resident in VMEM; reduce over the last axis."""
    x = x_ref[...].astype(jnp.float32)
    mean = jnp.mean(x, axis=-1, keepdims=True)
    xc = x - mean  # centered temp, reused for variance and the output
    # torch.Tensor.std is the unbiased estimator (ddof=1); d == 1 -> 0/0 = nan,
    # matching the PyTorch reference.
    var = jnp.sum(xc * xc, axis=-1, keepdims=True) / (d - 1)
    std = jnp.sqrt(var) + eps
    inv = 1.0 / std
    o_ref[...] = (xc * inv).astype(o_ref.dtype)


def _ln_chunked_kernel(x_ref, o_ref, sum_ref, sq_ref, *, eps, d):
    """Two-pass over feature chunks: p=0 accumulates stats, p=1 normalizes."""
    p = pl.program_id(1)
    k = pl.program_id(2)
    x = x_ref[...].astype(jnp.float32)

    @pl.when(jnp.logical_and(p == 0, k == 0))
    def _():
        sum_ref[...] = jnp.zeros_like(sum_ref)
        sq_ref[...] = jnp.zeros_like(sq_ref)

    @pl.when(p == 0)
    def _():
        sum_ref[...] += jnp.sum(x, axis=-1, keepdims=True)
        sq_ref[...] += jnp.sum(x * x, axis=-1, keepdims=True)
        o_ref[...] = x_ref[...]  # deterministic placeholder; rewritten in pass 1

    @pl.when(p == 1)
    def _():
        mean = sum_ref[...] * (1.0 / d)
        var = (sq_ref[...] - sum_ref[...] * mean) / (d - 1)
        var = jnp.maximum(var, 0.0)  # guard tiny negative from cancellation
        std = jnp.sqrt(var) + eps
        inv = 1.0 / std
        o_ref[...] = ((x - mean) * inv).astype(o_ref.dtype)


def _row_tiled_call(x2d, row_tile, eps, vmem_limit, cost):
    rows, d = x2d.shape
    grid = (pl.cdiv(rows, row_tile),)
    return pl.pallas_call(
        functools.partial(_ln_rows_kernel, eps=eps, d=d),
        out_shape=jax.ShapeDtypeStruct((rows, d), x2d.dtype),
        grid_spec=pltpu.PrefetchScalarGridSpec(
            num_scalar_prefetch=0,
            grid=grid,
            in_specs=[pl.BlockSpec((row_tile, d), lambda i: (i, 0))],
            out_specs=pl.BlockSpec((row_tile, d), lambda i: (i, 0)),
        ),
        compiler_params=pltpu.CompilerParams(
            dimension_semantics=("parallel",),
            vmem_limit_bytes=vmem_limit,
        ),
        cost_estimate=cost,
    )(x2d)


def _chunked_call(x2d, row_tile, chunk, eps, vmem_limit, cost):
    rows, d = x2d.shape
    n_chunks = d // chunk
    grid = (pl.cdiv(rows, row_tile), 2, n_chunks)
    return pl.pallas_call(
        functools.partial(_ln_chunked_kernel, eps=eps, d=d),
        out_shape=jax.ShapeDtypeStruct((rows, d), x2d.dtype),
        grid_spec=pltpu.PrefetchScalarGridSpec(
            num_scalar_prefetch=0,
            grid=grid,
            in_specs=[pl.BlockSpec((row_tile, chunk), lambda i, p, k: (i, k))],
            out_specs=pl.BlockSpec((row_tile, chunk), lambda i, p, k: (i, k)),
            scratch_shapes=[
                pltpu.VMEM((row_tile, 1), jnp.float32),  # per-row sum
                pltpu.VMEM((row_tile, 1), jnp.float32),  # per-row sum of squares
            ],
        ),
        compiler_params=pltpu.CompilerParams(
            dimension_semantics=("parallel", "arbitrary", "arbitrary"),
            vmem_limit_bytes=vmem_limit,
        ),
        cost_estimate=cost,
    )(x2d)


def layer_norm(x, eps=1e-4, *, force_chunked=False, chunk=None):
    """Pallas TPU implementation of the reference LayerNorm.forward."""
    x_shape = x.shape
    if len(x_shape) <= 3:
        x2d = x.reshape(-1, x_shape[-1])
    else:
        x2d = x.reshape(x_shape[0], -1)
    rows, d = x2d.shape
    dtype_bytes = jnp.dtype(x2d.dtype).itemsize
    sub = _SUBLANE.get(dtype_bytes, 8)
    budget, vmem_limit = _vmem_caps()

    cost = pl.CostEstimate(
        flops=5 * rows * d,
        transcendentals=rows,
        bytes_accessed=2 * rows * d * dtype_bytes,
    )

    # Decide path: row-tiled (full feature axis per block) vs two-pass chunked.
    min_row_tile = rows if rows <= sub else sub
    min_ws = min_row_tile * d * (4 * dtype_bytes + 8)
    use_chunked = force_chunked or min_ws > budget

    if use_chunked:
        if chunk is not None and chunk > 0 and d % chunk == 0 and chunk % 128 == 0:
            cfg = (min_row_tile, chunk)
        else:
            cfg = _pick_chunk_cfg(rows, d, dtype_bytes, budget)
        if cfg is not None:
            row_tile, chunk_sz = cfg
            out2d = _chunked_call(x2d, row_tile, chunk_sz, eps, vmem_limit, cost)
            return out2d.reshape(x_shape)
        # No clean chunking (D not a multiple of 128): fall through to the
        # row-tiled path; may pressure VMEM for pathological D.

    row_tile = _pick_row_tile(rows, d, dtype_bytes, budget)
    out2d = _row_tiled_call(x2d, row_tile, eps, vmem_limit, cost)
    return out2d.reshape(x_shape)


def _reference(x, eps=1e-4):
    x_shape = x.shape
    if len(x_shape) <= 3:
        x2d = x.reshape(-1, x_shape[-1])
    else:
        x2d = x.reshape(x_shape[0], -1)
    mean = jnp.mean(x2d, axis=-1, keepdims=True)
    std = jnp.std(x2d, axis=-1, keepdims=True, ddof=1) + eps
    return ((x2d - mean) / std).reshape(x_shape)


if __name__ == "__main__":
    key = jax.random.PRNGKey(0)
    k1, k2, k3 = jax.random.split(key, 3)

    # 1) 4-D NCHW input (typical use after a conv): rows = N = 2, D = C*H*W = 1024.
    x4 = jax.random.normal(k1, (2, 4, 16, 16), dtype=jnp.float32)
    out4 = jax.block_until_ready(layer_norm(x4, eps=1e-4))
    assert out4.shape == x4.shape
    assert jnp.allclose(out4, _reference(x4, 1e-4), atol=1e-5, rtol=1e-5)

    # 2) 3-D input with a row count that is not a multiple of 8: exercises the
    #    cdiv grid, >=2 grid steps, and the padded/discarded partial last block.
    x3 = jax.random.normal(k2, (5, 5, 128), dtype=jnp.float32)
    out3 = jax.block_until_ready(layer_norm(x3, eps=1e-4))
    assert out3.shape == x3.shape
    assert jnp.allclose(out3, _reference(x3, 1e-4), atol=1e-5, rtol=1e-5)

    # 3) Two-pass feature-chunked path (auto-selected for huge D / small N),
    #    forced here at a small shape so it is exercised too.
    x4b = jax.random.normal(k3, (16, 1, 32, 32), dtype=jnp.float32)
    out4b = jax.block_until_ready(layer_norm(x4b, eps=1e-4, force_chunked=True, chunk=256))
    assert out4b.shape == x4b.shape
    assert jnp.allclose(out4b, _reference(x4b, 1e-4), atol=1e-4, rtol=1e-4)

    print("KERNEL_OK")
</pallas_src>

<mosaic_0001>
module attributes {stable_mosaic.version = 11 : i64} {
  func.func @_ln_rows_kernel(%arg0: i32, %arg1: memref<2x1024xf32, #tpu.memory_space<vmem>>, %arg2: memref<2x1024xf32, #tpu.memory_space<vmem>>) attributes {dimension_semantics = [#tpu.dimension_semantics<parallel>], iteration_bounds = array<i64: 1>, scalar_prefetch = 0 : i64, scratch_operands = 0 : i64, tpu.core_type = #tpu.core_type<tc>, window_params = [{transform_indices = @transform_0, window_bounds = array<i64: 2, 1024>}, {transform_indices = @transform_1, window_bounds = array<i64: 2, 1024>}]} {
    %c0 = arith.constant 0 : index
    %c0_0 = arith.constant 0 : index
    %0 = vector.load %arg1[%c0, %c0_0] : memref<2x1024xf32, #tpu.memory_space<vmem>>, vector<2x1024xf32>
    %cst = arith.constant dense<0.000000e+00> : vector<2xf32>
    %1 = vector.multi_reduction <add>, %0, %cst [1] : vector<2x1024xf32> to vector<2xf32>
    %2 = vector.shape_cast %1 : vector<2xf32> to vector<2x1xf32>
    %cst_1 = arith.constant 1.024000e+03 : f32
    %3 = vector.broadcast %cst_1 : f32 to vector<2x1xf32>
    %4 = arith.divf %2, %3 : vector<2x1xf32>
    %5 = vector.broadcast %4 : vector<2x1xf32> to vector<2x1024xf32>
    %6 = arith.subf %0, %5 : vector<2x1024xf32>
    %7 = arith.mulf %6, %6 : vector<2x1024xf32>
    %cst_2 = arith.constant dense<0.000000e+00> : vector<2xf32>
    %8 = vector.multi_reduction <add>, %7, %cst_2 [1] : vector<2x1024xf32> to vector<2xf32>
    %9 = vector.shape_cast %8 : vector<2xf32> to vector<2x1xf32>
    %cst_3 = arith.constant 1.023000e+03 : f32
    %10 = vector.broadcast %cst_3 : f32 to vector<2x1xf32>
    %11 = arith.divf %9, %10 : vector<2x1xf32>
    %12 = math.sqrt %11 : vector<2x1xf32>
    %cst_4 = arith.constant 9.99999974E-5 : f32
    %13 = vector.broadcast %cst_4 : f32 to vector<2x1xf32>
    %14 = arith.addf %12, %13 : vector<2x1xf32>
    %cst_5 = arith.constant 1.000000e+00 : f32
    %15 = vector.broadcast %cst_5 : f32 to vector<2x1xf32>
    %16 = arith.divf %15, %14 : vector<2x1xf32>
    %17 = vector.broadcast %16 : vector<2x1xf32> to vector<2x1024xf32>
    %18 = arith.mulf %6, %17 : vector<2x1024xf32>
    %c0_6 = arith.constant 0 : index
    %c0_7 = arith.constant 0 : index
    %19 = vector.load %arg2[%c0_6, %c0_7] : memref<2x1024xf32, #tpu.memory_space<vmem>>, vector<2x1024xf32>
    tpu.vector_store %arg2[%c0_6, %c0_7], %18 {strides = array<i32>} : memref<2x1024xf32, #tpu.memory_space<vmem>>, vector<2x1024xf32>,
    return
  }
  func.func @transform_0(%arg0: i32) -> (i32, i32) {
    %c0_i32 = arith.constant 0 : i32
    %c0_i32_0 = arith.constant 0 : i32
    return %arg0, %c0_i32 : i32, i32
  }
  func.func @transform_1(%arg0: i32) -> (i32, i32) {
    %c0_i32 = arith.constant 0 : i32
    %c0_i32_0 = arith.constant 0 : i32
    return %arg0, %c0_i32 : i32, i32
  }
}

</mosaic_0001>

<llo_original>
// kernel: tpu_custom_call.1
$region0: #{tpu_custom_call.1}
  #allocation0 [shape = 'u32[]', space=smem, size = 0x4, offset = 0x4, fixed_abs, tag = 'smem constant byte address 0x4 - core index']
  #allocation1 [shape = 'u32[72,128]{1,0:T(1,128)}', space=vmem, size = 0x9000, scoped, tag = 'internal scratch']
  %s0 = inlined_call_operand.hbm [shape: f32[2,1024], index: 0, kind: input, shape index: {}]
  %s1 = inlined_call_operand.hbm [shape: f32[2,1024], index: 1, kind: output, shape index: {}]
  %s2 = sld [smem:[#allocation0]]
  $region18: #{tpu_custom_call.1} parent=0
    _
  %s4 = ssub.s32 1, %s2
  %s5 = scalar_select 0, %s4, %s2
  $region1: #{tpu_custom_call.1} parent=0
    #allocation2 [shape = 'u8[8192]{0}', space=vmem, size = 0x2000, scoped, tag = 'input window, operand 0, single buffered']
    #allocation3 [shape = 's32[1]{0}', space=sflag, size = 0x4, scoped, tag = 'scoped memory for tpu_custom_call.1']
    #allocation4 [shape = 's32[1]{0}', space=sflag, size = 0x4, scoped, tag = 'scoped memory for tpu_custom_call.1']
    #allocation5 [shape = 'u8[8192]{0}', space=vmem, size = 0x2000, scoped, tag = 'output window, operand 0, single buffered']
    %6 = vsyncpa [#allocation3], 0
    %7 = vsyncpa [#allocation4], 0
    // Predicated region
    $region2: #{tpu_custom_call.1} parent=1 // pred_check
      _
    $region3: #{tpu_custom_call.1} parent=1 // pred_check_branch
      %9 = sbr.rel (0) target = $region5
    $region4: #{tpu_custom_call.1} parent=1 // pred_region
      %11 = vsyncadd [#allocation3], 0
      %s13 = sshll.u32 %s0, 4
      %s14 = int_to_ptr.hbm [resolvable:$true] %s13
      %s15 = sshll.u32 [#allocation2], 4
      %s16 = int_to_ptr.vmem [resolvable:$true] %s15
      %18 = dma.hbm_to_vmem [thread:$0]  %s14, 256, %s16, [#allocation3]
    $region5: #{tpu_custom_call.1} parent=1 // pred_fallthru
      _
    // Predicated region
    $region6: #{tpu_custom_call.1} parent=1 // pred_check
      _
    $region7: #{tpu_custom_call.1} parent=1 // pred_check_branch
      %20 = sbr.rel (0) target = $region9
    $region8: #{tpu_custom_call.1} parent=1 // pred_region
      %22 = dma.done [#allocation3], 256
    $region9: #{tpu_custom_call.1} parent=1 // pred_fallthru
      _
    %v23 = vld [vmem:[#allocation2] sm:$0xff]
    %v24 = vld [vmem:[#allocation2 + $0x8] sm:$0xff]
    %27 = vst [vmem:[#allocation1] ss:$4 sm:$0xff] %v23
    %s28 = scalar_lea.vmem [#allocation1], 32
    %29 = vst [vmem:[%s28] ss:$4 sm:$0xff] %v24
    %v30 = vld.sshfl [vmem:[#allocation1] sm:$0xff pattern:$0x73625140]
    %v31 = vld.sshfl [vmem:[#allocation1 + $0x8] sm:$0xff pattern:$0x73625140]
    %v32 = vld.sshfl [vmem:[#allocation1 + $0x10] sm:$0xff pattern:$0x73625140]
    %v33 = vld.sshfl [vmem:[#allocation1 + $0x18] sm:$0xff pattern:$0x73625140]
    %v34 = vld.sshfl [vmem:[#allocation1 + $0x20] sm:$0xff pattern:$0x73625140]
    %v35 = vld.sshfl [vmem:[#allocation1 + $0x28] sm:$0xff pattern:$0x73625140]
    %v36 = vld.sshfl [vmem:[#allocation1 + $0x30] sm:$0xff pattern:$0x73625140]
    %v37 = vld.sshfl [vmem:[#allocation1 + $0x38] sm:$0xff pattern:$0x73625140]
    %vm46 = vcmask 1041408
    %v47 = vsel %vm46, %v30, 0.0
    %v48 = vsel %vm46, %v31, 0.0
    %v49 = vadd.f32 %v47, %v48
    %v50 = vsel %vm46, %v32, 0.0
    %v51 = vadd.f32 %v49, %v50
    %v52 = vsel %vm46, %v33, 0.0
    %v53 = vadd.f32 %v51, %v52
    %v54 = vsel %vm46, %v34, 0.0
    %v55 = vadd.f32 %v53, %v54
    %v56 = vsel %vm46, %v35, 0.0
    %v57 = vadd.f32 %v55, %v56
    %v58 = vsel %vm46, %v36, 0.0
    %v59 = vadd.f32 %v57, %v58
    %v60 = vsel %vm46, %v37, 0.0
    %v61 = vadd.f32 %v59, %v60
    %62 = vadd.xlane.f32.xlu0 %v61
    %v63 = vpop.xlane.xlu0 %62
    %v64 = vrcp.pop 1024.0
    %v65 = vmul.f32 1024.0, %v64
    %v66 = vsub.f32 1.0, %v65
    %v67 = vmul.f32 %v64, %v66
    %v68 = vadd.f32 %v64, %v67
    %vm69 = vweird.f32 %v64
    %v70 = vsel %vm69, %v64, %v68
    %v71 = vmul.f32 %v63, %v70
    %v74 = vunpack.c.l.s4 269488144
    %v75 = vunpack.c.0.s8 %v74
    %v76 = vperm.slane %v71, %v75
    %v78 = vsub.f32 %v23, %v76
    %v79 = vsub.f32 %v24, %v76
    %v80 = vmul.f32 %v78, %v78
    %v81 = vmul.f32 %v79, %v79
    %84 = vst [vmem:[#allocation1] ss:$4 sm:$0xff] %v80
    %s85 = scalar_lea.vmem [#allocation1], 32
    %86 = vst [vmem:[%s85] ss:$4 sm:$0xff] %v81
    %v87 = vld.sshfl [vmem:[#allocation1] sm:$0xff pattern:$0x73625140]
    %v88 = vld.sshfl [vmem:[#allocation1 + $0x8] sm:$0xff pattern:$0x73625140]
    %v89 = vld.sshfl [vmem:[#allocation1 + $0x10] sm:$0xff pattern:$0x73625140]
    %v90 = vld.sshfl [vmem:[#allocation1 + $0x18] sm:$0xff pattern:$0x73625140]
    %v91 = vld.sshfl [vmem:[#allocation1 + $0x20] sm:$0xff pattern:$0x73625140]
    %v92 = vld.sshfl [vmem:[#allocation1 + $0x28] sm:$0xff pattern:$0x73625140]
    %v93 = vld.sshfl [vmem:[#allocation1 + $0x30] sm:$0xff pattern:$0x73625140]
    %v94 = vld.sshfl [vmem:[#allocation1 + $0x38] sm:$0xff pattern:$0x73625140]
    %v103 = vsel %vm46, %v87, 0.0
    %v104 = vsel %vm46, %v88, 0.0
    %v105 = vadd.f32 %v103, %v104
    %v106 = vsel %vm46, %v89, 0.0
    %v107 = vadd.f32 %v105, %v106
    %v108 = vsel %vm46, %v90, 0.0
    %v109 = vadd.f32 %v107, %v108
    %v110 = vsel %vm46, %v91, 0.0
    %v111 = vadd.f32 %v109, %v110
    %v112 = vsel %vm46, %v92, 0.0
    %v113 = vadd.f32 %v111, %v112
    %v114 = vsel %vm46, %v93, 0.0
    %v115 = vadd.f32 %v113, %v114
    %v116 = vsel %vm46, %v94, 0.0
    %v117 = vadd.f32 %v115, %v116
    %118 = vadd.xlane.f32.xlu0 %v117
    %v119 = vpop.xlane.xlu0 %118
    %v120 = vrcp.pop 1023.0
    %v121 = vmul.f32 1023.0, %v120
    %v122 = vsub.f32 1.0, %v121
    %v123 = vmul.f32 %v120, %v122
    %v124 = vadd.f32 %v120, %v123
    %vm125 = vweird.f32 %v120
    %v126 = vsel %vm125, %v120, %v124
    %v127 = vmul.f32 %v119, %v126
    %v128 = vrsqrt.pop %v127
    %v129 = vmul.f32 %v128, %v127
    %v130 = vmul.f32 %v129, %v128
    %v131 = vmul.f32 0.5, %v130
    %v132 = vsub.f32 1.5, %v131
    %v133 = vmul.f32 %v128, %v132
    %v134 = vmul.f32 %v127, %v133
    %vm135 = vcmp.eq.f32.partialorder %v127, inf
    %v136 = vsel %vm135, %v127, %v134
    %vm137 = vcmp.eq.f32.partialorder %v127, 0.0
    %v138 = vand.u32 %v127, 2147483648
    %v139 = vsel %vm137, %v138, %v136
    %v140 = vadd.f32 %v139, 0.0001
    %v141 = vrcp.pop %v140
    %v142 = vmul.f32 %v140, %v141
    %v143 = vsub.f32 1.0, %v142
    %v144 = vmul.f32 %v141, %v143
    %v145 = vadd.f32 %v141, %v144
    %vm146 = vweird.f32 %v140
    %vm147 = vweird.f32 %v141
    %vm148 = vmor %vm146, %vm147
    %v149 = vsel %vm148, %v141, %v145
    %v150 = vand.u32 2147483647, %v140
    %vm151 = vcmp.eq.f32.partialorder %v150, 8.507059e+37
    %v152 = vand.u32 %v140, 2147483648
    %v153 = vor.u32 1.1754944e-38, %v152
    %v154 = vsel %vm151, %v153, %v149
    %v155 = vmul.f32 1.0, %v154
    %v158 = vunpack.c.l.s4 269488144
    %v159 = vunpack.c.0.s8 %v158
    %v160 = vperm.slane %v155, %v159
    %v162 = vmul.f32 %v78, %v160
    %v163 = vmul.f32 %v79, %v160
    %164 = vst [vmem:[#allocation5] sm:$0xff] %v162
    %165 = vst [vmem:[#allocation5 + $0x8] sm:$0xff] %v163
    // Predicated region
    $region10: #{tpu_custom_call.1} parent=1 // pred_check
      _
    $region11: #{tpu_custom_call.1} parent=1 // pred_check_branch
      %167 = sbr.rel (0) target = $region13
    $region12: #{tpu_custom_call.1} parent=1 // pred_region
      %169 = vsyncadd [#allocation4], 0
      %s171 = sshll.u32 [#allocation5], 4
      %s172 = int_to_ptr.vmem [resolvable:$true] %s171
      %s173 = sshll.u32 %s1, 4
      %s174 = int_to_ptr.hbm [resolvable:$true] %s173
      %176 = dma.vmem_to_hbm [thread:$0]  %s172, 256, %s174, [#allocation4]
    $region13: #{tpu_custom_call.1} parent=1 // pred_fallthru
      _
    // Predicated region
    $region14: #{tpu_custom_call.1} parent=1 // pred_check
      _
    $region15: #{tpu_custom_call.1} parent=1 // pred_check_branch
      %178 = sbr.rel (0) target = $region17
    $region16: #{tpu_custom_call.1} parent=1 // pred_region
      %180 = dma.done [#allocation4], 256
    $region17: #{tpu_custom_call.1} parent=1 // pred_fallthru
      _
    %181 = vsyncpa [#allocation3], 1
    %182 = vsyncpa [#allocation4], 1

</llo_original>
